<compile_context>
chip_gen: v7x
topology: tpu7x:2x2x1
jax: 0.10.0
libtpu: 0.0.40
codegen_flags: <defaults>
</compile_context>

<pallas_src>
import functools

import jax
import jax.numpy as jnp
from jax import lax
from jax.experimental import pallas as pl
from jax.experimental.pallas import tpu as pltpu

_LN_EPS = 1e-5


def _round_up(x, m):
    return ((x + m - 1) // m) * m


def _vmem_capacity_bytes():
    try:
        cap = getattr(pltpu.get_tpu_info(), "vmem_capacity_bytes", None)
        if cap:
            return int(cap)
    except Exception:
        pass
    return 64 << 20  # conservative floor (v7x per-TensorCore VMEM)


def _num_tensorcores():
    try:
        return max(1, int(getattr(jax.devices()[0], "num_cores", 1) or 1))
    except Exception:
        return 1


def _pick_tile_rows(n_rows, n_cores):
    """Row-tile size: single big tile on 1-TC chips (amortize ~0.35us per-step
    overhead, fill the MXU M dim); even multi-step grid on multi-TC chips."""
    n8 = _round_up(max(n_rows, 8), 8)
    if n_cores > 1 and n8 >= 256:
        for tm in (512, 256, 128):
            if n8 >= 2 * tm:
                return tm
        return 128
    return min(n8, 512)


def _const_spec(shape):
    """Grid-invariant input: constant index_map, single-buffered if supported."""
    index_map = lambda i: (0,) * len(shape)
    try:
        return pl.BlockSpec(shape, index_map, pipeline_mode=pl.Buffered(1))
    except TypeError:  # older jax without pipeline_mode kwarg
        return pl.BlockSpec(shape, index_map)


def _encoder_kernel(ids_ref, pid_ref, tok_ref, pos_ref, w_ref, b_ref, o_ref,
                    *, d_true):
    """Fused one-hot gather + LayerNorm + dense projection for one row tile."""
    tm = ids_ref.shape[0]
    v_pad = tok_ref.shape[0]
    s_pad = pos_ref.shape[0]

    ids = ids_ref[...]                                  # (TM, 1) int32
    pids = pid_ref[...]                                 # (TM, 1) int32

    # One-hot MXU gather (vectorized; OOB ids select nothing -> zero row).
    oh_tok = (ids == lax.broadcasted_iota(jnp.int32, (tm, v_pad), 1)
              ).astype(jnp.bfloat16)
    oh_pos = (pids == lax.broadcasted_iota(jnp.int32, (tm, s_pad), 1)
              ).astype(jnp.bfloat16)
    x = jnp.dot(oh_tok, tok_ref[...], preferred_element_type=jnp.float32)
    x = x + jnp.dot(oh_pos, pos_ref[...], preferred_element_type=jnp.float32)
    # x: (TM, D_pad) f32; padded feature lanes are exactly zero.

    # LayerNorm over the TRUE feature width (no masking needed: padded lanes
    # of x are zero; padded lanes of xn hit zero-padded rows of W).
    inv_d = 1.0 / d_true
    mean = jnp.sum(x, axis=-1, keepdims=True) * inv_d
    ex2 = jnp.sum(x * x, axis=-1, keepdims=True) * inv_d
    var = ex2 - mean * mean
    xn = (x - mean) * lax.rsqrt(var + _LN_EPS)

    # Dense projection on the MXU: bf16 operands, f32 accumulation.
    h = jnp.dot(xn.astype(jnp.bfloat16), w_ref[...],
                preferred_element_type=jnp.float32)
    o_ref[...] = (h + b_ref[...]).astype(o_ref.dtype)


def prepare_params(params):
    """One-time padding / casting of encoder parameters (out of the hot path)."""
    tok, pos = params["tok_emb"], params["pos_emb"]
    w, b = params["w"], params["b"]
    V, D = tok.shape
    S_max = pos.shape[0]
    D_pad = _round_up(D, 128)
    V_pad = _round_up(V, 128)
    S_pad = _round_up(S_max, 128)
    return {
        "tok": jnp.pad(tok, ((0, V_pad - V), (0, D_pad - D))).astype(jnp.bfloat16),
        "pos": jnp.pad(pos, ((0, S_pad - S_max), (0, D_pad - D))).astype(jnp.bfloat16),
        "w": jnp.pad(w, ((0, D_pad - D), (0, D_pad - D))).astype(jnp.bfloat16),
        "b": jnp.pad(b, ((0, 0), (0, D_pad - D))).astype(jnp.float32),
        "vocab": V, "emb_dim": D, "max_seq": S_max,
    }


def text_embedder_forward(condition, prepped):
    """Pallas-backed TextEmbedder.forward.

    condition: int32 token ids, shape [B, S]
    returns:   float32 last hidden state, shape [B, S, emb_dim]
    """
    tok_p, pos_p = prepped["tok"], prepped["pos"]
    w_p, b_p = prepped["w"], prepped["b"]
    D = prepped["emb_dim"]
    S_max = prepped["max_seq"]
    V_pad, D_pad = tok_p.shape
    S_pad = pos_p.shape[0]

    B, S = condition.shape
    assert S <= S_max, f"sequence length {S} exceeds positional table {S_max}"

    N = B * S
    n_cores = _num_tensorcores()
    TM = _pick_tile_rows(N, n_cores)
    step_quant = TM * (2 if (n_cores > 1 and N > TM) else 1)
    N_pad = _round_up(N, step_quant)
    grid = (N_pad // TM,)

    ids = jnp.pad(condition.reshape(N).astype(jnp.int32),
                  (0, N_pad - N)).reshape(N_pad, 1)
    pos_ids = jnp.pad(jnp.tile(jnp.arange(S, dtype=jnp.int32), B),
                      (0, N_pad - N)).reshape(N_pad, 1)

    # VMEM plan: single-buffered invariant tables (bf16) + double-buffered id
    # tiles and output tile; cap by the chip's physical VMEM with headroom.
    pinned = (V_pad * D_pad + S_pad * D_pad + D_pad * D_pad) * 2 + D_pad * 4
    streamed = 2 * (2 * TM * 4) + 2 * TM * D_pad * 4
    needed = pinned + streamed
    vmem_limit = int(min(max(2 * needed, 32 << 20),
                         int(_vmem_capacity_bytes() * 0.85)))

    kernel = functools.partial(_encoder_kernel, d_true=D)

    out_flat = pl.pallas_call(
        kernel,
        out_shape=jax.ShapeDtypeStruct((N_pad, D_pad), jnp.float32),
        grid_spec=pltpu.PrefetchScalarGridSpec(
            num_scalar_prefetch=0,
            grid=grid,
            in_specs=[
                pl.BlockSpec((TM, 1), lambda i: (i, 0)),   # token ids
                pl.BlockSpec((TM, 1), lambda i: (i, 0)),   # position ids
                _const_spec((V_pad, D_pad)),               # token table (bf16)
                _const_spec((S_pad, D_pad)),               # position table (bf16)
                _const_spec((D_pad, D_pad)),               # W (bf16)
                _const_spec((1, D_pad)),                   # b (f32)
            ],
            out_specs=pl.BlockSpec((TM, D_pad), lambda i: (i, 0)),
        ),
        compiler_params=pltpu.CompilerParams(
            dimension_semantics=("parallel",),
            vmem_limit_bytes=vmem_limit,
        ),
    )(ids, pos_ids, tok_p, pos_p, w_p, b_p)

    if N_pad == N and D_pad == D:
        return out_flat.reshape(B, S, D)
    # TODO(synk): for production, let downstream consume the padded slab (or
    # keep D a multiple of 128) to avoid this extra HBM slice pass.
    return out_flat[:N, :D].reshape(B, S, D)


def init_params(key, vocab=64, max_seq=8, emb_dim=32):
    k0, k1, k2, k3 = jax.random.split(key, 4)
    return {
        "tok_emb": jax.random.normal(k0, (vocab, emb_dim), jnp.float32) * 0.02,
        "pos_emb": jax.random.normal(k1, (max_seq, emb_dim), jnp.float32) * 0.02,
        "w": jax.random.normal(k2, (emb_dim, emb_dim), jnp.float32) * 0.02,
        "b": jax.random.normal(k3, (1, emb_dim), jnp.float32) * 0.02,
    }


def _reference(condition, params):
    """Pure-JAX reference of the synthetic encoder (bf16 tables / MXU operands)."""
    tok = params["tok_emb"].astype(jnp.bfloat16).astype(jnp.float32)
    pos = params["pos_emb"].astype(jnp.bfloat16).astype(jnp.float32)
    w = params["w"].astype(jnp.bfloat16)
    b = params["b"].astype(jnp.float32)
    S = condition.shape[1]
    h = tok[condition] + pos[:S][None, :, :]
    mean = jnp.mean(h, axis=-1, keepdims=True)
    c = h - mean
    var = jnp.mean(c * c, axis=-1, keepdims=True)
    xn = c * jax.lax.rsqrt(var + _LN_EPS)
    out = jnp.dot(xn.astype(jnp.bfloat16), w,
                  preferred_element_type=jnp.float32) + b
    return out.astype(jnp.float32)


if __name__ == "__main__":
    key = jax.random.PRNGKey(0)
    B, S, V, D = 2, 8, 64, 32

    pkey, ckey = jax.random.split(key)
    params = init_params(pkey, vocab=V, max_seq=S, emb_dim=D)
    condition = jax.random.randint(ckey, (B, S), 0, V, dtype=jnp.int32)

    prepped = prepare_params(params)          # one-time parameter prep
    out = jax.block_until_ready(text_embedder_forward(condition, prepped))
    ref = jax.block_until_ready(_reference(condition, params))

    assert out.shape == (B, S, D), out.shape
    assert out.dtype == jnp.float32, out.dtype
    max_err = float(jnp.max(jnp.abs(out - ref)))
    assert jnp.allclose(out, ref, atol=2e-2, rtol=2e-2), max_err
    print("KERNEL_OK")
</pallas_src>

<mosaic_0001>
module attributes {stable_mosaic.version = 11 : i64} {
  func.func @_encoder_kernel(%arg0: i32, %arg1: memref<16x1xi32, #tpu.memory_space<vmem>>, %arg2: memref<16x1xi32, #tpu.memory_space<vmem>>, %arg3: memref<128x128xbf16, #tpu.memory_space<vmem>>, %arg4: memref<128x128xbf16, #tpu.memory_space<vmem>>, %arg5: memref<128x128xbf16, #tpu.memory_space<vmem>>, %arg6: memref<1x128xf32, #tpu.memory_space<vmem>>, %arg7: memref<16x128xf32, #tpu.memory_space<vmem>>) attributes {dimension_semantics = [#tpu.dimension_semantics<parallel>], iteration_bounds = array<i64: 1>, scalar_prefetch = 0 : i64, scratch_operands = 0 : i64, tpu.core_type = #tpu.core_type<tc>, window_params = [{transform_indices = @transform_0, window_bounds = array<i64: 16, 1>}, {transform_indices = @transform_1, window_bounds = array<i64: 16, 1>}, {pipeline_mode = #tpu.pipeline_mode<synchronous>, transform_indices = @transform_2, window_bounds = array<i64: 128, 128>}, {pipeline_mode = #tpu.pipeline_mode<synchronous>, transform_indices = @transform_3, window_bounds = array<i64: 128, 128>}, {pipeline_mode = #tpu.pipeline_mode<synchronous>, transform_indices = @transform_4, window_bounds = array<i64: 128, 128>}, {pipeline_mode = #tpu.pipeline_mode<synchronous>, transform_indices = @transform_5, window_bounds = array<i64: 1, 128>}, {transform_indices = @transform_6, window_bounds = array<i64: 16, 128>}]} {
    %c0 = arith.constant 0 : index
    %c0_0 = arith.constant 0 : index
    %0 = vector.load %arg1[%c0, %c0_0] : memref<16x1xi32, #tpu.memory_space<vmem>>, vector<16x1xi32>
    %c0_1 = arith.constant 0 : index
    %c0_2 = arith.constant 0 : index
    %1 = vector.load %arg2[%c0_1, %c0_2] : memref<16x1xi32, #tpu.memory_space<vmem>>, vector<16x1xi32>
    %2 = tpu.iota {dimensions = array<i32: 1>} : vector<16x128xi32>
    %3 = vector.broadcast %0 : vector<16x1xi32> to vector<16x128xi32>
    %4 = arith.cmpi eq, %3, %2 : vector<16x128xi32>
    %5 = arith.extui %4 : vector<16x128xi1> to vector<16x128xi32>
    %6 = arith.sitofp %5 : vector<16x128xi32> to vector<16x128xf32>
    %7 = arith.truncf %6 : vector<16x128xf32> to vector<16x128xbf16>
    %8 = tpu.iota {dimensions = array<i32: 1>} : vector<16x128xi32>
    %9 = vector.broadcast %1 : vector<16x1xi32> to vector<16x128xi32>
    %10 = arith.cmpi eq, %9, %8 : vector<16x128xi32>
    %11 = arith.extui %10 : vector<16x128xi1> to vector<16x128xi32>
    %12 = arith.sitofp %11 : vector<16x128xi32> to vector<16x128xf32>
    %13 = arith.truncf %12 : vector<16x128xf32> to vector<16x128xbf16>
    %c0_3 = arith.constant 0 : index
    %c0_4 = arith.constant 0 : index
    %14 = vector.load %arg3[%c0_3, %c0_4] : memref<128x128xbf16, #tpu.memory_space<vmem>>, vector<128x128xbf16>
    %cst = arith.constant dense<0.000000e+00> : vector<16x128xf32>
    %15 = tpu.matmul %7, %14, %cst {dimension_numbers = #tpu.dot_dimension_numbers<[1], [0], [0], [1], [0, 0, 1, 1], [], []>} : vector<16x128xbf16>, vector<128x128xbf16>, vector<16x128xf32> -> vector<16x128xf32>
    %c0_5 = arith.constant 0 : index
    %c0_6 = arith.constant 0 : index
    %16 = vector.load %arg4[%c0_5, %c0_6] : memref<128x128xbf16, #tpu.memory_space<vmem>>, vector<128x128xbf16>
    %cst_7 = arith.constant dense<0.000000e+00> : vector<16x128xf32>
    %17 = tpu.matmul %13, %16, %cst_7 {dimension_numbers = #tpu.dot_dimension_numbers<[1], [0], [0], [1], [0, 0, 1, 1], [], []>} : vector<16x128xbf16>, vector<128x128xbf16>, vector<16x128xf32> -> vector<16x128xf32>
    %18 = arith.addf %15, %17 : vector<16x128xf32>
    %cst_8 = arith.constant dense<0.000000e+00> : vector<16xf32>
    %19 = vector.multi_reduction <add>, %18, %cst_8 [1] : vector<16x128xf32> to vector<16xf32>
    %20 = vector.shape_cast %19 : vector<16xf32> to vector<16x1xf32>
    %cst_9 = arith.constant 3.125000e-02 : f32
    %21 = vector.broadcast %cst_9 : f32 to vector<16x1xf32>
    %22 = arith.mulf %20, %21 : vector<16x1xf32>
    %23 = arith.mulf %18, %18 : vector<16x128xf32>
    %cst_10 = arith.constant dense<0.000000e+00> : vector<16xf32>
    %24 = vector.multi_reduction <add>, %23, %cst_10 [1] : vector<16x128xf32> to vector<16xf32>
    %25 = vector.shape_cast %24 : vector<16xf32> to vector<16x1xf32>
    %cst_11 = arith.constant 3.125000e-02 : f32
    %26 = vector.broadcast %cst_11 : f32 to vector<16x1xf32>
    %27 = arith.mulf %25, %26 : vector<16x1xf32>
    %28 = arith.mulf %22, %22 : vector<16x1xf32>
    %29 = arith.subf %27, %28 : vector<16x1xf32>
    %30 = vector.broadcast %22 : vector<16x1xf32> to vector<16x128xf32>
    %31 = arith.subf %18, %30 : vector<16x128xf32>
    %cst_12 = arith.constant 9.99999974E-6 : f32
    %32 = vector.broadcast %cst_12 : f32 to vector<16x1xf32>
    %33 = arith.addf %29, %32 : vector<16x1xf32>
    %34 = math.rsqrt %33 : vector<16x1xf32>
    %35 = vector.broadcast %34 : vector<16x1xf32> to vector<16x128xf32>
    %36 = arith.mulf %31, %35 : vector<16x128xf32>
    %37 = arith.truncf %36 : vector<16x128xf32> to vector<16x128xbf16>
    %c0_13 = arith.constant 0 : index
    %c0_14 = arith.constant 0 : index
    %38 = vector.load %arg5[%c0_13, %c0_14] : memref<128x128xbf16, #tpu.memory_space<vmem>>, vector<128x128xbf16>
    %cst_15 = arith.constant dense<0.000000e+00> : vector<16x128xf32>
    %39 = tpu.matmul %37, %38, %cst_15 {dimension_numbers = #tpu.dot_dimension_numbers<[1], [0], [0], [1], [0, 0, 1, 1], [], []>} : vector<16x128xbf16>, vector<128x128xbf16>, vector<16x128xf32> -> vector<16x128xf32>
    %c0_16 = arith.constant 0 : index
    %c0_17 = arith.constant 0 : index
    %40 = vector.load %arg6[%c0_16, %c0_17] : memref<1x128xf32, #tpu.memory_space<vmem>>, vector<1x128xf32>
    %41 = vector.broadcast %40 : vector<1x128xf32> to vector<16x128xf32>
    %42 = arith.addf %39, %41 : vector<16x128xf32>
    %c0_18 = arith.constant 0 : index
    %c0_19 = arith.constant 0 : index
    %43 = vector.load %arg7[%c0_18, %c0_19] : memref<16x128xf32, #tpu.memory_space<vmem>>, vector<16x128xf32>
    tpu.vector_store %arg7[%c0_18, %c0_19], %42 {strides = array<i32>} : memref<16x128xf32, #tpu.memory_space<vmem>>, vector<16x128xf32>,
    return
  }
  func.func @transform_0(%arg0: i32) -> (i32, i32) {
    %c0_i32 = arith.constant 0 : i32
    %c0_i32_0 = arith.constant 0 : i32
    return %arg0, %c0_i32 : i32, i32
  }
  func.func @transform_1(%arg0: i32) -> (i32, i32) {
    %c0_i32 = arith.constant 0 : i32
    %c0_i32_0 = arith.constant 0 : i32
    return %arg0, %c0_i32 : i32, i32
  }
  func.func @transform_2(%arg0: i32) -> (i32, i32) {
    %c0_i32 = arith.constant 0 : i32
    %c0_i32_0 = arith.constant 0 : i32
    %c0_i32_1 = arith.constant 0 : i32
    return %c0_i32, %c0_i32_0 : i32, i32
  }
  func.func @transform_3(%arg0: i32) -> (i32, i32) {
    %c0_i32 = arith.constant 0 : i32
    %c0_i32_0 = arith.constant 0 : i32
    %c0_i32_1 = arith.constant 0 : i32
    return %c0_i32, %c0_i32_0 : i32, i32
  }
  func.func @transform_4(%arg0: i32) -> (i32, i32) {
    %c0_i32 = arith.constant 0 : i32
    %c0_i32_0 = arith.constant 0 : i32
    %c0_i32_1 = arith.constant 0 : i32
    return %c0_i32, %c0_i32_0 : i32, i32
  }
  func.func @transform_5(%arg0: i32) -> (i32, i32) {
    %c0_i32 = arith.constant 0 : i32
    %c0_i32_0 = arith.constant 0 : i32
    %c0_i32_1 = arith.constant 0 : i32
    return %c0_i32, %c0_i32_0 : i32, i32
  }
  func.func @transform_6(%arg0: i32) -> (i32, i32) {
    %c0_i32 = arith.constant 0 : i32
    %c0_i32_0 = arith.constant 0 : i32
    return %arg0, %c0_i32 : i32, i32
  }
}

</mosaic_0001>

<llo_original>
// kernel: tpu_custom_call.1
$region0: #{tpu_custom_call.1}
  #allocation0 [shape = 'u32[]', space=smem, size = 0x4, offset = 0x4, fixed_abs, tag = 'smem constant byte address 0x4 - core index']
  #allocation1 [shape = 'u32[144,128]{1,0:T(1,128)}', space=vmem, size = 0x12000, scoped, tag = 'internal scratch']
  %s0 = inlined_call_operand.vmem [shape: s32[16,1], index: 0, kind: input, shape index: {}]
  %s1 = inlined_call_operand.vmem [shape: s32[16,1], index: 1, kind: input, shape index: {}]
  %s2 = inlined_call_operand.hbm [shape: bf16[128,128], index: 2, kind: input, shape index: {}]
  %s3 = inlined_call_operand.hbm [shape: bf16[128,128], index: 3, kind: input, shape index: {}]
  %s4 = inlined_call_operand.hbm [shape: bf16[128,128], index: 4, kind: input, shape index: {}]
  %s5 = inlined_call_operand.vmem [shape: f32[1,128], index: 5, kind: input, shape index: {}]
  %s6 = inlined_call_operand.hbm [shape: f32[16,128], index: 6, kind: output, shape index: {}]
  %s7 = sld [smem:[#allocation0]]
  $region46: #{tpu_custom_call.1} parent=0
    _
  %s9 = ssub.s32 1, %s7
  %s10 = scalar_select 0, %s9, %s7
  $region1: #{tpu_custom_call.1} parent=0
    #allocation2 [shape = 'u8[32768]{0}', space=vmem, size = 0x8000, scoped, tag = 'input window, operand 2, single buffered']
    #allocation3 [shape = 's32[1]{0}', space=sflag, size = 0x4, scoped, tag = 'scoped memory for tpu_custom_call.1']
    #allocation4 [shape = 's32[1]{0}', space=sflag, size = 0x4, scoped, tag = 'scoped memory for tpu_custom_call.1']
    #allocation5 [shape = 'u8[32768]{0}', space=vmem, size = 0x8000, scoped, tag = 'input window, operand 3, single buffered']
    #allocation6 [shape = 's32[1]{0}', space=sflag, size = 0x4, scoped, tag = 'scoped memory for tpu_custom_call.1']
    #allocation7 [shape = 'u8[32768]{0}', space=vmem, size = 0x8000, scoped, tag = 'input window, operand 4, single buffered']
    #allocation8 [shape = 'u8[8192]{0}', space=vmem, size = 0x2000, scoped, tag = 'output window, operand 0, single buffered']
    %11 = vsyncpa [#allocation3], 0
    %12 = vsyncpa [#allocation6], 0
    %13 = vsyncpa [#allocation4], 0
    // Predicated region
    $region2: #{tpu_custom_call.1} parent=1 // pred_check
      _
    $region3: #{tpu_custom_call.1} parent=1 // pred_check_branch
      %15 = sbr.rel (0) target = $region5
    $region4: #{tpu_custom_call.1} parent=1 // pred_region
      _
    $region5: #{tpu_custom_call.1} parent=1 // pred_fallthru
      _
    // Predicated region
    $region6: #{tpu_custom_call.1} parent=1 // pred_check
      _
    $region7: #{tpu_custom_call.1} parent=1 // pred_check_branch
      %17 = sbr.rel (0) target = $region9
    $region8: #{tpu_custom_call.1} parent=1 // pred_region
      _
    $region9: #{tpu_custom_call.1} parent=1 // pred_fallthru
      _
    // Predicated region
    $region10: #{tpu_custom_call.1} parent=1 // pred_check
      _
    $region11: #{tpu_custom_call.1} parent=1 // pred_check_branch
      %19 = sbr.rel (0) target = $region13
    $region12: #{tpu_custom_call.1} parent=1 // pred_region
      %s21 = ssub.s32 1024, 1024
      %22 = vsyncadd [#allocation3], %s21
      %s23 = sshll.u32 [#allocation2], 4
      %s24 = int_to_ptr.vmem [resolvable:$true] %s23
      %29 = dma.hbm_to_vmem [thread:$0]  %s2, 1024, %s24, [#allocation3], 64, 64, 4
    $region13: #{tpu_custom_call.1} parent=1 // pred_fallthru
      _
    // Predicated region
    $region14: #{tpu_custom_call.1} parent=1 // pred_check
      _
    $region15: #{tpu_custom_call.1} parent=1 // pred_check_branch
      %31 = sbr.rel (0) target = $region17
    $region16: #{tpu_custom_call.1} parent=1 // pred_region
      %s33 = ssub.s32 1024, 1024
      %34 = vsyncadd [#allocation6], %s33
      %s35 = sshll.u32 [#allocation5], 4
      %s36 = int_to_ptr.vmem [resolvable:$true] %s35
      %41 = dma.hbm_to_vmem [thread:$0]  %s3, 1024, %s36, [#allocation6], 64, 64, 4
    $region17: #{tpu_custom_call.1} parent=1 // pred_fallthru
      _
    // Predicated region
    $region18: #{tpu_custom_call.1} parent=1 // pred_check
      _
    $region19: #{tpu_custom_call.1} parent=1 // pred_check_branch
      %43 = sbr.rel (0) target = $region21
    $region20: #{tpu_custom_call.1} parent=1 // pred_region
      %s45 = ssub.s32 1024, 1024
      %46 = vsyncadd [#allocation6], %s45
      %s47 = sshll.u32 [#allocation7], 4
      %s48 = int_to_ptr.vmem [resolvable:$true] %s47
      %53 = dma.hbm_to_vmem [thread:$0]  %s4, 1024, %s48, [#allocation6], 64, 64, 4
    $region21: #{tpu_custom_call.1} parent=1 // pred_fallthru
      _
    // Predicated region
    $region22: #{tpu_custom_call.1} parent=1 // pred_check
      _
    $region23: #{tpu_custom_call.1} parent=1 // pred_check_branch
      %55 = sbr.rel (0) target = $region25
    $region24: #{tpu_custom_call.1} parent=1 // pred_region
      _
    $region25: #{tpu_custom_call.1} parent=1 // pred_fallthru
      _
    // Predicated region
    $region26: #{tpu_custom_call.1} parent=1 // pred_check
      _
    $region27: #{tpu_custom_call.1} parent=1 // pred_check_branch
      %57 = sbr.rel (0) target = $region29
    $region28: #{tpu_custom_call.1} parent=1 // pred_region
      %58 = dma.done [#allocation3], 1024
    $region29: #{tpu_custom_call.1} parent=1 // pred_fallthru
      _
    // Predicated region
    $region30: #{tpu_custom_call.1} parent=1 // pred_check
      _
    $region31: #{tpu_custom_call.1} parent=1 // pred_check_branch
      %60 = sbr.rel (0) target = $region33
    $region32: #{tpu_custom_call.1} parent=1 // pred_region
      %61 = dma.done [#allocation6], 1024
    $region33: #{tpu_custom_call.1} parent=1 // pred_fallthru
      _
    // Predicated region
    $region34: #{tpu_custom_call.1} parent=1 // pred_check
      _
    $region35: #{tpu_custom_call.1} parent=1 // pred_check_branch
      %63 = sbr.rel (0) target = $region37
    $region36: #{tpu_custom_call.1} parent=1 // pred_region
      %64 = dma.done [#allocation6], 1024
    $region37: #{tpu_custom_call.1} parent=1 // pred_fallthru
      _
    %v66 = vld [vmem:[%s0] sm:$0xff]
    %v67 = vld [vmem:[%s0 + $0x8] sm:$0xff]
    %v68 = vld [vmem:[%s1] sm:$0xff]
    %v69 = vld [vmem:[%s1 + $0x8] sm:$0xff]
    %v70 = vlaneseq
    %v71 = vand.u32 %v70, 127
    %72 = vset.pattern.permute.xlu0 0
    %73 = vperm.xlu0 %72, %v66
    %v74 = vpop.permute.xlu0 %73
    %75 = vset.pattern.permute.xlu0 0
    %76 = vperm.xlu0 %75, %v67
    %v77 = vpop.permute.xlu0 %76
    %vm78 = vcmp.eq.s32.totalorder %v74, %v71
    %vm79 = vcmp.eq.s32.totalorder %v77, %v71
    %v80 = vsel %vm78, 1, 0
    %v81 = vsel %vm79, 1, 0
    %v82 = vcvt.s32.f32 %v80
    %v83 = vcvt.s32.f32 %v81
    %v84 = vpack.c.bf16 %v83, %v82
    %85 = vset.pattern.permute.xlu0 0
    %86 = vperm.xlu0 %85, %v68
    %v87 = vpop.permute.xlu0 %86
    %88 = vset.pattern.permute.xlu0 0
    %89 = vperm.xlu0 %88, %v69
    %v90 = vpop.permute.xlu0 %89
    %vm91 = vcmp.eq.s32.totalorder %v87, %v71
    %vm92 = vcmp.eq.s32.totalorder %v90, %v71
    %v93 = vsel %vm91, 1, 0
    %v94 = vsel %vm92, 1, 0
    %v95 = vcvt.s32.f32 %v93
    %v96 = vcvt.s32.f32 %v94
    %v97 = vpack.c.bf16 %v96, %v95
    %v98 = vld [vmem:[#allocation2] sm:$0xf]
    %v99 = vld [vmem:[#allocation2 + $0x4] sm:$0xf]
    %v100 = vld [vmem:[#allocation2 + $0x8] sm:$0xf]
    %v101 = vld [vmem:[#allocation2 + $0xc] sm:$0xf]
    %v102 = vld [vmem:[#allocation2 + $0x10] sm:$0xf]
    %v103 = vld [vmem:[#allocation2 + $0x14] sm:$0xf]
    %v104 = vld [vmem:[#allocation2 + $0x18] sm:$0xf]
    %v105 = vld [vmem:[#allocation2 + $0x1c] sm:$0xf]
    %v106 = vld [vmem:[#allocation2 + $0x20] sm:$0xf]
    %v107 = vld [vmem:[#allocation2 + $0x24] sm:$0xf]
    %v108 = vld [vmem:[#allocation2 + $0x28] sm:$0xf]
    %v109 = vld [vmem:[#allocation2 + $0x2c] sm:$0xf]
    %v110 = vld [vmem:[#allocation2 + $0x30] sm:$0xf]
    %v111 = vld [vmem:[#allocation2 + $0x34] sm:$0xf]
    %v112 = vld [vmem:[#allocation2 + $0x38] sm:$0xf]
    %v113 = vld [vmem:[#allocation2 + $0x3c] sm:$0xf]
    %v114 = vld [vmem:[#allocation5] sm:$0xf]
    %v115 = vld [vmem:[#allocation5 + $0x4] sm:$0xf]
    %v116 = vld [vmem:[#allocation5 + $0x8] sm:$0xf]
    %v117 = vld [vmem:[#allocation5 + $0xc] sm:$0xf]
    %v118 = vld [vmem:[#allocation5 + $0x10] sm:$0xf]
    %v119 = vld [vmem:[#allocation5 + $0x14] sm:$0xf]
    %v120 = vld [vmem:[#allocation5 + $0x18] sm:$0xf]
    %v121 = vld [vmem:[#allocation5 + $0x1c] sm:$0xf]
    %v122 = vld [vmem:[#allocation5 + $0x20] sm:$0xf]
    %v123 = vld [vmem:[#allocation5 + $0x24] sm:$0xf]
    %v124 = vld [vmem:[#allocation5 + $0x28] sm:$0xf]
    %v125 = vld [vmem:[#allocation5 + $0x2c] sm:$0xf]
    %v126 = vld [vmem:[#allocation5 + $0x30] sm:$0xf]
    %v127 = vld [vmem:[#allocation5 + $0x34] sm:$0xf]
    %v128 = vld [vmem:[#allocation5 + $0x38] sm:$0xf]
    %v129 = vld [vmem:[#allocation5 + $0x3c] sm:$0xf]
    %v146 = vunpack.c.l.b16 %v114
    %v147 = vunpack.c.l.b16 %v115
    %v148 = vunpack.c.l.b16 %v116
    %v149 = vunpack.c.l.b16 %v117
    %v150 = vunpack.c.l.b16 %v118
    %v151 = vunpack.c.l.b16 %v119
    %v152 = vunpack.c.l.b16 %v120
    %v153 = vunpack.c.l.b16 %v121
    %v154 = vunpack.c.l.b16 %v122
    %v155 = vunpack.c.l.b16 %v123
    %v156 = vunpack.c.l.b16 %v124
    %v157 = vunpack.c.l.b16 %v125
    %v158 = vunpack.c.l.b16 %v126
    %v159 = vunpack.c.l.b16 %v127
    %v160 = vunpack.c.l.b16 %v128
    %v161 = vunpack.c.l.b16 %v129
    %v162 = vpack.c.b16 %v147, %v146
    %v163 = vpack.c.b16 %v149, %v148
    %v164 = vpack.c.b16 %v151, %v150
    %v165 = vpack.c.b16 %v153, %v152
    %v166 = vpack.c.b16 %v155, %v154
    %v167 = vpack.c.b16 %v157, %v156
    %v168 = vpack.c.b16 %v159, %v158
    %v169 = vpack.c.b16 %v161, %v160
    %178 = vmatprep.subr.bf16.mxu0 0
    %179 = vmatpush1.bf16.msra.mxu0 %v162
    %180 = vmatprep.subr.bf16.mxu0 0
    %181 = vmatpush1.bf16.msra.mxu0 %v163
    %182 = vmatprep.subr.bf16.mxu0 0
    %183 = vmatpush1.bf16.msra.mxu0 %v164
    %184 = vmatprep.subr.bf16.mxu0 0
    %185 = vmatpush1.bf16.msra.mxu0 %v165
    %186 = vmatprep.subr.bf16.mxu0 0
    %187 = vmatpush1.bf16.msra.mxu0 %v166
    %188 = vmatprep.subr.bf16.mxu0 0
    %189 = vmatpush1.bf16.msra.mxu0 %v167
    %190 = vmatprep.subr.bf16.mxu0 0
    %191 = vmatpush1.bf16.msra.mxu0 %v168
    %192 = vmatprep.subr.bf16.mxu0 0
    %193 = vmatpush1.bf16.msra.mxu0 %v169
    %194 = vmatprep.subr.bf16.mxu0 0
    %195 = vmatpush1.bf16.msra.mxu0 0
    %196 = vmatprep.subr.bf16.mxu0 0
    %197 = vmatpush1.bf16.msra.mxu0 0
    %198 = vmatprep.subr.bf16.mxu0 0
    %199 = vmatpush1.bf16.msra.mxu0 0
    %200 = vmatprep.subr.bf16.mxu0 0
    %201 = vmatpush1.bf16.msra.mxu0 0
    %202 = vmatprep.subr.bf16.mxu0 0
    %203 = vmatpush1.bf16.msra.mxu0 0
    %204 = vmatprep.subr.bf16.mxu0 0
    %205 = vmatpush1.bf16.msra.mxu0 0
    %206 = vmatprep.subr.bf16.mxu0 0
    %207 = vmatpush1.bf16.msra.mxu0 0
    %208 = vmatprep.subr.bf16.mxu0 0
    %209 = vmatpush1.bf16.msra.mxu0 0
    %210 = vmatprep.mubr.bf16.mxu0 0
    %211 = vmatmul.mubr.bf16.gmra.mrb[0].mxu0 %v97
    %v212 = vpop.f32.mrb[0].mxu0
    %v213 = vadd.f32 0.0, %v212
    %v214 = vpop.f32.mrb[0].mxu0
    %v215 = vpop.f32.mrb[0].mxu0
    %v216 = vadd.f32 0.0, %v215
    %v217 = vpop.f32.mrb[0].mxu0
    %218 = vdwg.mxu0
    %v235 = vunpack.c.l.b16 %v98
    %v236 = vunpack.c.l.b16 %v99
    %v237 = vunpack.c.l.b16 %v100
    %v238 = vunpack.c.l.b16 %v101
    %v239 = vunpack.c.l.b16 %v102
    %v240 = vunpack.c.l.b16 %v103
    %v241 = vunpack.c.l.b16 %v104
    %v242 = vunpack.c.l.b16 %v105
    %v243 = vunpack.c.l.b16 %v106
    %v244 = vunpack.c.l.b16 %v107
    %v245 = vunpack.c.l.b16 %v108
    %v246 = vunpack.c.l.b16 %v109
    %v247 = vunpack.c.l.b16 %v110
    %v248 = vunpack.c.l.b16 %v111
    %v249 = vunpack.c.l.b16 %v112
    %v250 = vunpack.c.l.b16 %v113
    %v251 = vpack.c.b16 %v236, %v235
    %v252 = vpack.c.b16 %v238, %v237
    %v253 = vpack.c.b16 %v240, %v239
    %v254 = vpack.c.b16 %v242, %v241
    %v255 = vpack.c.b16 %v244, %v243
    %v256 = vpack.c.b16 %v246, %v245
    %v257 = vpack.c.b16 %v248, %v247
    %v258 = vpack.c.b16 %v250, %v249
    %267 = vmatprep.subr.bf16.mxu0 0
    %268 = vmatpush1.bf16.msra.mxu0 %v251
    %269 = vmatprep.subr.bf16.mxu0 0
    %270 = vmatpush1.bf16.msra.mxu0 %v252
    %271 = vmatprep.subr.bf16.mxu0 0
    %272 = vmatpush1.bf16.msra.mxu0 %v253
    %273 = vmatprep.subr.bf16.mxu0 0
    %274 = vmatpush1.bf16.msra.mxu0 %v254
    %275 = vmatprep.subr.bf16.mxu0 0
    %276 = vmatpush1.bf16.msra.mxu0 %v255
    %277 = vmatprep.subr.bf16.mxu0 0
    %278 = vmatpush1.bf16.msra.mxu0 %v256
    %279 = vmatprep.subr.bf16.mxu0 0
    %280 = vmatpush1.bf16.msra.mxu0 %v257
    %281 = vmatprep.subr.bf16.mxu0 0
    %282 = vmatpush1.bf16.msra.mxu0 %v258
    %283 = vmatprep.subr.bf16.mxu0 0
    %284 = vmatpush1.bf16.msra.mxu0 0
    %285 = vmatprep.subr.bf16.mxu0 0
    %286 = vmatpush1.bf16.msra.mxu0 0
    %287 = vmatprep.subr.bf16.mxu0 0
    %288 = vmatpush1.bf16.msra.mxu0 0
    %289 = vmatprep.subr.bf16.mxu0 0
    %290 = vmatpush1.bf16.msra.mxu0 0
    %291 = vmatprep.subr.bf16.mxu0 0
    %292 = vmatpush1.bf16.msra.mxu0 0
    %293 = vmatprep.subr.bf16.mxu0 0
    %294 = vmatpush1.bf16.msra.mxu0 0
    %295 = vmatprep.subr.bf16.mxu0 0
    %296 = vmatpush1.bf16.msra.mxu0 0
    %297 = vmatprep.subr.bf16.mxu0 0
    %298 = vmatpush1.bf16.msra.mxu0 0
    %299 = vmatprep.mubr.bf16.mxu0 0
    %300 = vmatmul.mubr.bf16.gmra.mrb[0].mxu0 %v84
    %v301 = vpop.f32.mrb[0].mxu0
    %v302 = vadd.f32 %v213, %v301
    %v303 = vpop.f32.mrb[0].mxu0
    %v304 = vpop.f32.mrb[0].mxu0
    %v305 = vadd.f32 %v216, %v304
    %v306 = vpop.f32.mrb[0].mxu0
    %307 = vdwg.mxu0
    %308 = vadd.xlane.f32.xlu0 %v302
    %v309 = vpop.xlane.xlu0 %308
    %310 = vadd.xlane.f32.xlu0 %v305
    %v311 = vpop.xlane.xlu0 %310
    %v312 = vmul.f32 %v309, 0.03125
    %v313 = vmul.f32 %v311, 0.03125
    %v314 = vmul.f32 %v302, %v302
    %v315 = vmul.f32 %v305, %v305
    %316 = vadd.xlane.f32.xlu0 %v314
    %v317 = vpop.xlane.xlu0 %316
    %318 = vadd.xlane.f32.xlu0 %v315
    %v319 = vpop.xlane.xlu0 %318
    %v320 = vmul.f32 %v317, 0.03125
    %v321 = vmul.f32 %v319, 0.03125
    %v322 = vmul.f32 %v312, %v312
    %v323 = vmul.f32 %v313, %v313
    %v324 = vsub.f32 %v320, %v322
    %v325 = vsub.f32 %v321, %v323
    %v326 = vsub.f32 %v302, %v312
    %v327 = vsub.f32 %v305, %v313
    %v328 = vadd.f32 %v324, 1e-05
    %v329 = vadd.f32 %v325, 1e-05
    %v330 = vrsqrt.pop %v328
    %v331 = vrsqrt.pop %v329
    %v332 = vmul.f32 %v326, %v330
    %v333 = vmul.f32 %v327, %v331
    %v334 = vpack.c.bf16 %v333, %v332
    %v335 = vld [vmem:[#allocation7] sm:$0xf]
    %v336 = vld [vmem:[#allocation7 + $0x4] sm:$0xf]
    %v337 = vld [vmem:[#allocation7 + $0x8] sm:$0xf]
    %v338 = vld [vmem:[#allocation7 + $0xc] sm:$0xf]
    %v339 = vld [vmem:[#allocation7 + $0x10] sm:$0xf]
    %v340 = vld [vmem:[#allocation7 + $0x14] sm:$0xf]
    %v341 = vld [vmem:[#allocation7 + $0x18] sm:$0xf]
    %v342 = vld [vmem:[#allocation7 + $0x1c] sm:$0xf]
    %v343 = vld [vmem:[#allocation7 + $0x20] sm:$0xf]
    %v344 = vld [vmem:[#allocation7 + $0x24] sm:$0xf]
    %v345 = vld [vmem:[#allocation7 + $0x28] sm:$0xf]
    %v346 = vld [vmem:[#allocation7 + $0x2c] sm:$0xf]
    %v347 = vld [vmem:[#allocation7 + $0x30] sm:$0xf]
    %v348 = vld [vmem:[#allocation7 + $0x34] sm:$0xf]
    %v349 = vld [vmem:[#allocation7 + $0x38] sm:$0xf]
    %v350 = vld [vmem:[#allocation7 + $0x3c] sm:$0xf]
    %v351 = vld [vmem:[%s5] sm:$0x1]
    %v353 = vlaneseq
    %v354 = vshrl.u32 %v353, 7
    %v355 = vsub.s32 0, %v354
    %v356 = vrot.slane %v351, %v355
    %v374 = vunpack.c.l.b16 %v335
    %v375 = vunpack.c.l.b16 %v336
    %v376 = vunpack.c.l.b16 %v337
    %v377 = vunpack.c.l.b16 %v338
    %v378 = vunpack.c.l.b16 %v339
    %v379 = vunpack.c.l.b16 %v340
    %v380 = vunpack.c.l.b16 %v341
    %v381 = vunpack.c.l.b16 %v342
    %v382 = vunpack.c.l.b16 %v343
    %v383 = vunpack.c.l.b16 %v344
    %v384 = vunpack.c.l.b16 %v345
    %v385 = vunpack.c.l.b16 %v346
    %v386 = vunpack.c.l.b16 %v347
    %v387 = vunpack.c.l.b16 %v348
    %v388 = vunpack.c.l.b16 %v349
    %v389 = vunpack.c.l.b16 %v350
    %v390 = vpack.c.b16 %v375, %v374
    %v391 = vpack.c.b16 %v377, %v376
    %v392 = vpack.c.b16 %v379, %v378
    %v393 = vpack.c.b16 %v381, %v380
    %v394 = vpack.c.b16 %v383, %v382
    %v395 = vpack.c.b16 %v385, %v384
    %v396 = vpack.c.b16 %v387, %v386
    %v397 = vpack.c.b16 %v389, %v388
    %406 = vmatprep.subr.bf16.mxu0 0
    %407 = vmatpush1.bf16.msra.mxu0 %v390
    %408 = vmatprep.subr.bf16.mxu0 0
    %409 = vmatpush1.bf16.msra.mxu0 %v391
    %410 = vmatprep.subr.bf16.mxu0 0
    %411 = vmatpush1.bf16.msra.mxu0 %v392
    %412 = vmatprep.subr.bf16.mxu0 0
    %413 = vmatpush1.bf16.msra.mxu0 %v393
    %414 = vmatprep.subr.bf16.mxu0 0
    %415 = vmatpush1.bf16.msra.mxu0 %v394
    %416 = vmatprep.subr.bf16.mxu0 0
    %417 = vmatpush1.bf16.msra.mxu0 %v395
    %418 = vmatprep.subr.bf16.mxu0 0
    %419 = vmatpush1.bf16.msra.mxu0 %v396
    %420 = vmatprep.subr.bf16.mxu0 0
    %421 = vmatpush1.bf16.msra.mxu0 %v397
    %422 = vmatprep.subr.bf16.mxu0 0
    %423 = vmatpush1.bf16.msra.mxu0 0
    %424 = vmatprep.subr.bf16.mxu0 0
    %425 = vmatpush1.bf16.msra.mxu0 0
    %426 = vmatprep.subr.bf16.mxu0 0
    %427 = vmatpush1.bf16.msra.mxu0 0
    %428 = vmatprep.subr.bf16.mxu0 0
    %429 = vmatpush1.bf16.msra.mxu0 0
    %430 = vmatprep.subr.bf16.mxu0 0
    %431 = vmatpush1.bf16.msra.mxu0 0
    %432 = vmatprep.subr.bf16.mxu0 0
    %433 = vmatpush1.bf16.msra.mxu0 0
    %434 = vmatprep.subr.bf16.mxu0 0
    %435 = vmatpush1.bf16.msra.mxu0 0
    %436 = vmatprep.subr.bf16.mxu0 0
    %437 = vmatpush1.bf16.msra.mxu0 0
    %438 = vmatprep.mubr.bf16.mxu0 0
    %439 = vmatmul.mubr.bf16.gmra.mrb[0].mxu0 %v334
    %v440 = vpop.f32.mrb[0].mxu0
    %v441 = vadd.f32 %v356, %v440
    %v442 = vpop.f32.mrb[0].mxu0
    %v443 = vpop.f32.mrb[0].mxu0
    %v444 = vadd.f32 %v356, %v443
    %v445 = vpop.f32.mrb[0].mxu0
    %446 = vdwg.mxu0
    %447 = vst [vmem:[#allocation8] sm:$0xff] %v441
    %448 = vst [vmem:[#allocation8 + $0x8] sm:$0xff] %v444
    // Predicated region
    $region38: #{tpu_custom_call.1} parent=1 // pred_check
      _
    $region39: #{tpu_custom_call.1} parent=1 // pred_check_branch
      %450 = sbr.rel (0) target = $region41
    $region40: #{tpu_custom_call.1} parent=1 // pred_region
      %s452 = ssub.s32 256, 256
      %453 = vsyncadd [#allocation4], %s452
      %s454 = sshll.u32 [#allocation8], 4
      %s455 = int_to_ptr.vmem [resolvable:$true] %s454
      %460 = dma.vmem_to_hbm [thread:$0]  %s455, 256, %s6, [#allocation4], 128, 128, 8
    $region41: #{tpu_custom_call.1} parent=1 // pred_fallthru
      _
    // Predicated region
    $region42: #{tpu_custom_call.1} parent=1 // pred_check
      _
    $region43: #{tpu_custom_call.1} parent=1 // pred_check_branch
      %462 = sbr.rel (0) target = $region45
    $region44: #{tpu_custom_call.1} parent=1 // pred_region
      %463 = dma.done [#allocation4], 256
    $region45: #{tpu_custom_call.1} parent=1 // pred_fallthru
      _
    %464 = vsyncpa [#allocation3], 1
    %465 = vsyncpa [#allocation6], 1
    %466 = vsyncpa [#allocation4], 1

</llo_original>
